<compile_context>
chip_gen: v5e
topology: v5e:2x2
jax: 0.10.0
libtpu: 0.0.40
codegen_flags: <defaults>
</compile_context>

<pallas_src>
import jax
import jax.numpy as jnp
import numpy as np
from jax.experimental import pallas as pl
from jax.experimental.pallas import tpu as pltpu

NHIDDEN = 5          # matches module default
BN_EPS = 1e-5
LANE = 128
SUBLANE = 8
MAX_TB = 512         # batch-tile rows


def _round_up(x, m):
    return (x + m - 1) // m * m


def _silu(x):
    return x * jax.nn.sigmoid(x)


# ---------------------------------------------------------------------------
# Kernel: one (TB, P_in) batch tile of x -> (TB, P_out) tile of the output.
# All weights are full-array VMEM-resident blocks (constant index_map).
# ---------------------------------------------------------------------------
def mlp_kernel(x_ref,
               w_in_ref, b_in_ref,
               w_hid_ref, b_hid_ref,
               w_out_ref, b_out_ref,
               o_ref):
    # input layer: Linear -> SiLU -> Dropout(identity, eval)
    h = jnp.dot(x_ref[...], w_in_ref[...],
                preferred_element_type=jnp.float32) + b_in_ref[...]
    h = _silu(h)

    # hidden stack: 4x (Linear -> SiLU), statically unrolled
    for i in range(NHIDDEN - 1):
        h = jnp.dot(h, w_hid_ref[i],
                    preferred_element_type=jnp.float32) + b_hid_ref[i]
        h = _silu(h)

    # output projection (eval-mode BatchNorm already folded into w_out/b_out)
    out = jnp.dot(h, w_out_ref[...],
                  preferred_element_type=jnp.float32) + b_out_ref[...]
    o_ref[...] = out.astype(o_ref.dtype)


# ---------------------------------------------------------------------------
# Host-side parameter prep: fold eval-mode BN into the output projection and
# zero-pad all feature dims to lane multiples (128).
# ---------------------------------------------------------------------------
def fold_and_pad_params(params, in_dim, hidden_dim, out_dim):
    (w_in, b_in, w_hid, b_hid,
     bn_gamma, bn_beta, bn_mean, bn_var, w_out, b_out) = params

    # Fold BatchNorm1d (eval mode) into the output Linear.
    s = bn_gamma * jax.lax.rsqrt(bn_var + BN_EPS)      # (1, hid)
    t = bn_beta - bn_mean * s                          # (1, hid)
    w_out_f = s.reshape(-1, 1) * w_out                 # (hid, out)
    b_out_f = b_out + t @ w_out                        # (1, out)

    P_in = _round_up(in_dim, LANE)
    P_hid = _round_up(hidden_dim, LANE)
    P_out = _round_up(out_dim, LANE)

    def pad2(a, rows, cols):
        return jnp.zeros((rows, cols), a.dtype).at[:a.shape[0],
                                                   :a.shape[1]].set(a)

    w_in_p = pad2(w_in, P_in, P_hid)
    b_in_p = pad2(b_in, 1, P_hid)
    w_hid_p = (jnp.zeros((NHIDDEN - 1, P_hid, P_hid), w_hid.dtype)
               .at[:, :hidden_dim, :hidden_dim].set(w_hid))
    b_hid_p = (jnp.zeros((NHIDDEN - 1, 1, P_hid), b_hid.dtype)
               .at[:, :, :hidden_dim].set(b_hid))
    w_out_p = pad2(w_out_f, P_hid, P_out)
    b_out_p = pad2(b_out_f, 1, P_out)

    padded = (w_in_p, b_in_p, w_hid_p, b_hid_p, w_out_p, b_out_p)
    return padded, (P_in, P_hid, P_out)


# ---------------------------------------------------------------------------
# Wrapper: pad x on the batch/feature dims, launch the batch-tiled kernel,
# slice the result back to (B, out_dim).
# ---------------------------------------------------------------------------
def mlp_forward(x, padded_params, out_dim, pad_dims):
    w_in, b_in, w_hid, b_hid, w_out, b_out = padded_params
    P_in, P_hid, P_out = pad_dims
    B, in_dim = x.shape

    B8 = _round_up(B, SUBLANE)
    TB = min(MAX_TB, B8)
    B_pad = _round_up(B8, TB)
    grid = (B_pad // TB,)

    x_p = jnp.zeros((B_pad, P_in), x.dtype).at[:B, :in_dim].set(x)

    # VMEM budget: weights (single-buffered, constant index_map) +
    # double-buffered x/out tiles, with generous headroom, clamped to [4, 64] MiB.
    weight_bytes = sum(int(np.prod(a.shape)) * 4 for a in padded_params)
    act_bytes = 2 * 2 * TB * max(P_in, P_out) * 4
    vmem_limit = int(min(64 * 1024 * 1024,
                         max(4 * (weight_bytes + act_bytes),
                             4 * 1024 * 1024)))

    const2 = lambda i: (0, 0)
    const3 = lambda i: (0, 0, 0)

    out_p = pl.pallas_call(
        mlp_kernel,
        out_shape=jax.ShapeDtypeStruct((B_pad, P_out), x.dtype),
        grid=grid,
        in_specs=[
            pl.BlockSpec((TB, P_in), lambda i: (i, 0)),                 # x tile
            pl.BlockSpec((P_in, P_hid), const2),                        # w_in
            pl.BlockSpec((1, P_hid), const2),                           # b_in
            pl.BlockSpec((NHIDDEN - 1, P_hid, P_hid), const3),          # w_hid
            pl.BlockSpec((NHIDDEN - 1, 1, P_hid), const3),              # b_hid
            pl.BlockSpec((P_hid, P_out), const2),                       # w_out
            pl.BlockSpec((1, P_out), const2),                           # b_out
        ],
        out_specs=pl.BlockSpec((TB, P_out), lambda i: (i, 0)),
        compiler_params=pltpu.CompilerParams(
            dimension_semantics=("parallel",),
            vmem_limit_bytes=vmem_limit),
    )(x_p, w_in, b_in, w_hid, b_hid, w_out, b_out)

    return out_p[:B, :out_dim]


# ---------------------------------------------------------------------------
# Synthetic parameters matching the PyTorch module's shapes.  Linear weights
# are stored transposed as (in_features, out_features) so the kernel computes
# y = x @ W + b directly.  BN stats are made non-trivial so the fold is tested.
# ---------------------------------------------------------------------------
def init_params(key, in_dim, hidden_dim, out_dim):
    ks = jax.random.split(key, 12)
    w_in = jax.random.normal(ks[0], (in_dim, hidden_dim), jnp.float32) * 0.1
    b_in = jax.random.normal(ks[1], (1, hidden_dim), jnp.float32) * 0.01
    w_hid = jax.random.normal(ks[2], (NHIDDEN - 1, hidden_dim, hidden_dim),
                              jnp.float32) * 0.1
    b_hid = jax.random.normal(ks[3], (NHIDDEN - 1, 1, hidden_dim),
                              jnp.float32) * 0.01
    bn_gamma = 1.0 + 0.1 * jax.random.normal(ks[4], (1, hidden_dim), jnp.float32)
    bn_beta = 0.1 * jax.random.normal(ks[5], (1, hidden_dim), jnp.float32)
    bn_mean = 0.1 * jax.random.normal(ks[6], (1, hidden_dim), jnp.float32)
    bn_var = 1.0 + 0.1 * jnp.abs(jax.random.normal(ks[7], (1, hidden_dim),
                                                   jnp.float32))
    w_out = jax.random.normal(ks[8], (hidden_dim, out_dim), jnp.float32) * 0.1
    b_out = jax.random.normal(ks[9], (1, out_dim), jnp.float32) * 0.01
    return (w_in, b_in, w_hid, b_hid,
            bn_gamma, bn_beta, bn_mean, bn_var, w_out, b_out)


def mlp_reference(x, params):
    """Pure-JAX reference (eval-mode semantics) on the UNPADDED parameters."""
    (w_in, b_in, w_hid, b_hid,
     bn_gamma, bn_beta, bn_mean, bn_var, w_out, b_out) = params
    h = _silu(x @ w_in + b_in)                      # dropout = identity (eval)
    for i in range(NHIDDEN - 1):
        h = _silu(h @ w_hid[i] + b_hid[i])
    h = (h - bn_mean) / jnp.sqrt(bn_var + BN_EPS) * bn_gamma + bn_beta
    return h @ w_out + b_out


if __name__ == "__main__":
    B, in_dim, hidden_dim, out_dim = 8, 16, 32, 8

    key = jax.random.PRNGKey(0)
    kx, kp = jax.random.split(key)
    x = jax.random.normal(kx, (B, in_dim), jnp.float32)
    params = init_params(kp, in_dim, hidden_dim, out_dim)

    padded_params, pad_dims = fold_and_pad_params(params, in_dim,
                                                  hidden_dim, out_dim)

    out = mlp_forward(x, padded_params, out_dim, pad_dims)
    out = jax.block_until_ready(out)

    ref = mlp_reference(x, params)
    np.testing.assert_allclose(np.asarray(out), np.asarray(ref),
                               rtol=1e-4, atol=1e-4)
    print("KERNEL_OK")
</pallas_src>

<mosaic_0001>
module attributes {stable_mosaic.version = 11 : i64} {
  func.func @mlp_kernel(%arg0: i32, %arg1: memref<8x128xf32, #tpu.memory_space<vmem>>, %arg2: memref<128x128xf32, #tpu.memory_space<vmem>>, %arg3: memref<1x128xf32, #tpu.memory_space<vmem>>, %arg4: memref<4x128x128xf32, #tpu.memory_space<vmem>>, %arg5: memref<4x1x128xf32, #tpu.memory_space<vmem>>, %arg6: memref<128x128xf32, #tpu.memory_space<vmem>>, %arg7: memref<1x128xf32, #tpu.memory_space<vmem>>, %arg8: memref<8x128xf32, #tpu.memory_space<vmem>>) attributes {dimension_semantics = [#tpu.dimension_semantics<parallel>], iteration_bounds = array<i64: 1>, scalar_prefetch = 0 : i64, scratch_operands = 0 : i64, tpu.core_type = #tpu.core_type<tc>, window_params = [{transform_indices = @transform_0, window_bounds = array<i64: 8, 128>}, {pipeline_mode = #tpu.pipeline_mode<synchronous>, transform_indices = @transform_1, window_bounds = array<i64: 128, 128>}, {pipeline_mode = #tpu.pipeline_mode<synchronous>, transform_indices = @transform_2, window_bounds = array<i64: 1, 128>}, {pipeline_mode = #tpu.pipeline_mode<synchronous>, transform_indices = @transform_3, window_bounds = array<i64: 4, 128, 128>}, {pipeline_mode = #tpu.pipeline_mode<synchronous>, transform_indices = @transform_4, window_bounds = array<i64: 4, 1, 128>}, {pipeline_mode = #tpu.pipeline_mode<synchronous>, transform_indices = @transform_5, window_bounds = array<i64: 128, 128>}, {pipeline_mode = #tpu.pipeline_mode<synchronous>, transform_indices = @transform_6, window_bounds = array<i64: 1, 128>}, {transform_indices = @transform_7, window_bounds = array<i64: 8, 128>}]} {
    %c0 = arith.constant 0 : index
    %c0_0 = arith.constant 0 : index
    %0 = vector.load %arg1[%c0, %c0_0] : memref<8x128xf32, #tpu.memory_space<vmem>>, vector<8x128xf32>
    %c0_1 = arith.constant 0 : index
    %c0_2 = arith.constant 0 : index
    %1 = vector.load %arg2[%c0_1, %c0_2] : memref<128x128xf32, #tpu.memory_space<vmem>>, vector<128x128xf32>
    %cst = arith.constant dense<0.000000e+00> : vector<8x128xf32>
    %2 = tpu.matmul %0, %1, %cst {dimension_numbers = #tpu.dot_dimension_numbers<[1], [0], [0], [1], [0, 0, 1, 1], [], []>} : vector<8x128xf32>, vector<128x128xf32>, vector<8x128xf32> -> vector<8x128xf32>
    %c0_3 = arith.constant 0 : index
    %c0_4 = arith.constant 0 : index
    %3 = vector.load %arg3[%c0_3, %c0_4] : memref<1x128xf32, #tpu.memory_space<vmem>>, vector<1x128xf32>
    %4 = vector.broadcast %3 : vector<1x128xf32> to vector<8x128xf32>
    %5 = arith.addf %2, %4 : vector<8x128xf32>
    %6 = arith.negf %5 : vector<8x128xf32>
    %7 = math.exp %6 : vector<8x128xf32>
    %cst_5 = arith.constant 1.000000e+00 : f32
    %8 = vector.broadcast %cst_5 : f32 to vector<8x128xf32>
    %9 = arith.addf %8, %7 : vector<8x128xf32>
    %10 = arith.divf %8, %9 : vector<8x128xf32>
    %11 = arith.mulf %5, %10 : vector<8x128xf32>
    %c0_6 = arith.constant 0 : index
    %c0_7 = arith.constant 0 : index
    %c0_8 = arith.constant 0 : index
    %12 = vector.load %arg4[%c0_6, %c0_7, %c0_8] : memref<4x128x128xf32, #tpu.memory_space<vmem>>, vector<1x128x128xf32>
    %13 = vector.shape_cast %12 : vector<1x128x128xf32> to vector<128x128xf32>
    %cst_9 = arith.constant dense<0.000000e+00> : vector<8x128xf32>
    %14 = tpu.matmul %11, %13, %cst_9 {dimension_numbers = #tpu.dot_dimension_numbers<[1], [0], [0], [1], [0, 0, 1, 1], [], []>} : vector<8x128xf32>, vector<128x128xf32>, vector<8x128xf32> -> vector<8x128xf32>
    %c0_10 = arith.constant 0 : index
    %c0_11 = arith.constant 0 : index
    %c0_12 = arith.constant 0 : index
    %15 = vector.load %arg5[%c0_10, %c0_11, %c0_12] : memref<4x1x128xf32, #tpu.memory_space<vmem>>, vector<1x1x128xf32>
    %16 = vector.shape_cast %15 : vector<1x1x128xf32> to vector<1x128xf32>
    %17 = vector.broadcast %16 : vector<1x128xf32> to vector<8x128xf32>
    %18 = arith.addf %14, %17 : vector<8x128xf32>
    %19 = arith.negf %18 : vector<8x128xf32>
    %20 = math.exp %19 : vector<8x128xf32>
    %cst_13 = arith.constant 1.000000e+00 : f32
    %21 = vector.broadcast %cst_13 : f32 to vector<8x128xf32>
    %22 = arith.addf %21, %20 : vector<8x128xf32>
    %23 = arith.divf %21, %22 : vector<8x128xf32>
    %24 = arith.mulf %18, %23 : vector<8x128xf32>
    %c1 = arith.constant 1 : index
    %c0_14 = arith.constant 0 : index
    %c0_15 = arith.constant 0 : index
    %25 = vector.load %arg4[%c1, %c0_14, %c0_15] : memref<4x128x128xf32, #tpu.memory_space<vmem>>, vector<1x128x128xf32>
    %26 = vector.shape_cast %25 : vector<1x128x128xf32> to vector<128x128xf32>
    %cst_16 = arith.constant dense<0.000000e+00> : vector<8x128xf32>
    %27 = tpu.matmul %24, %26, %cst_16 {dimension_numbers = #tpu.dot_dimension_numbers<[1], [0], [0], [1], [0, 0, 1, 1], [], []>} : vector<8x128xf32>, vector<128x128xf32>, vector<8x128xf32> -> vector<8x128xf32>
    %c1_17 = arith.constant 1 : index
    %c0_18 = arith.constant 0 : index
    %c0_19 = arith.constant 0 : index
    %28 = vector.load %arg5[%c1_17, %c0_18, %c0_19] : memref<4x1x128xf32, #tpu.memory_space<vmem>>, vector<1x1x128xf32>
    %29 = vector.shape_cast %28 : vector<1x1x128xf32> to vector<1x128xf32>
    %30 = vector.broadcast %29 : vector<1x128xf32> to vector<8x128xf32>
    %31 = arith.addf %27, %30 : vector<8x128xf32>
    %32 = arith.negf %31 : vector<8x128xf32>
    %33 = math.exp %32 : vector<8x128xf32>
    %cst_20 = arith.constant 1.000000e+00 : f32
    %34 = vector.broadcast %cst_20 : f32 to vector<8x128xf32>
    %35 = arith.addf %34, %33 : vector<8x128xf32>
    %36 = arith.divf %34, %35 : vector<8x128xf32>
    %37 = arith.mulf %31, %36 : vector<8x128xf32>
    %c2 = arith.constant 2 : index
    %c0_21 = arith.constant 0 : index
    %c0_22 = arith.constant 0 : index
    %38 = vector.load %arg4[%c2, %c0_21, %c0_22] : memref<4x128x128xf32, #tpu.memory_space<vmem>>, vector<1x128x128xf32>
    %39 = vector.shape_cast %38 : vector<1x128x128xf32> to vector<128x128xf32>
    %cst_23 = arith.constant dense<0.000000e+00> : vector<8x128xf32>
    %40 = tpu.matmul %37, %39, %cst_23 {dimension_numbers = #tpu.dot_dimension_numbers<[1], [0], [0], [1], [0, 0, 1, 1], [], []>} : vector<8x128xf32>, vector<128x128xf32>, vector<8x128xf32> -> vector<8x128xf32>
    %c2_24 = arith.constant 2 : index
    %c0_25 = arith.constant 0 : index
    %c0_26 = arith.constant 0 : index
    %41 = vector.load %arg5[%c2_24, %c0_25, %c0_26] : memref<4x1x128xf32, #tpu.memory_space<vmem>>, vector<1x1x128xf32>
    %42 = vector.shape_cast %41 : vector<1x1x128xf32> to vector<1x128xf32>
    %43 = vector.broadcast %42 : vector<1x128xf32> to vector<8x128xf32>
    %44 = arith.addf %40, %43 : vector<8x128xf32>
    %45 = arith.negf %44 : vector<8x128xf32>
    %46 = math.exp %45 : vector<8x128xf32>
    %cst_27 = arith.constant 1.000000e+00 : f32
    %47 = vector.broadcast %cst_27 : f32 to vector<8x128xf32>
    %48 = arith.addf %47, %46 : vector<8x128xf32>
    %49 = arith.divf %47, %48 : vector<8x128xf32>
    %50 = arith.mulf %44, %49 : vector<8x128xf32>
    %c3 = arith.constant 3 : index
    %c0_28 = arith.constant 0 : index
    %c0_29 = arith.constant 0 : index
    %51 = vector.load %arg4[%c3, %c0_28, %c0_29] : memref<4x128x128xf32, #tpu.memory_space<vmem>>, vector<1x128x128xf32>
    %52 = vector.shape_cast %51 : vector<1x128x128xf32> to vector<128x128xf32>
    %cst_30 = arith.constant dense<0.000000e+00> : vector<8x128xf32>
    %53 = tpu.matmul %50, %52, %cst_30 {dimension_numbers = #tpu.dot_dimension_numbers<[1], [0], [0], [1], [0, 0, 1, 1], [], []>} : vector<8x128xf32>, vector<128x128xf32>, vector<8x128xf32> -> vector<8x128xf32>
    %c3_31 = arith.constant 3 : index
    %c0_32 = arith.constant 0 : index
    %c0_33 = arith.constant 0 : index
    %54 = vector.load %arg5[%c3_31, %c0_32, %c0_33] : memref<4x1x128xf32, #tpu.memory_space<vmem>>, vector<1x1x128xf32>
    %55 = vector.shape_cast %54 : vector<1x1x128xf32> to vector<1x128xf32>
    %56 = vector.broadcast %55 : vector<1x128xf32> to vector<8x128xf32>
    %57 = arith.addf %53, %56 : vector<8x128xf32>
    %58 = arith.negf %57 : vector<8x128xf32>
    %59 = math.exp %58 : vector<8x128xf32>
    %cst_34 = arith.constant 1.000000e+00 : f32
    %60 = vector.broadcast %cst_34 : f32 to vector<8x128xf32>
    %61 = arith.addf %60, %59 : vector<8x128xf32>
    %62 = arith.divf %60, %61 : vector<8x128xf32>
    %63 = arith.mulf %57, %62 : vector<8x128xf32>
    %c0_35 = arith.constant 0 : index
    %c0_36 = arith.constant 0 : index
    %64 = vector.load %arg6[%c0_35, %c0_36] : memref<128x128xf32, #tpu.memory_space<vmem>>, vector<128x128xf32>
    %cst_37 = arith.constant dense<0.000000e+00> : vector<8x128xf32>
    %65 = tpu.matmul %63, %64, %cst_37 {dimension_numbers = #tpu.dot_dimension_numbers<[1], [0], [0], [1], [0, 0, 1, 1], [], []>} : vector<8x128xf32>, vector<128x128xf32>, vector<8x128xf32> -> vector<8x128xf32>
    %c0_38 = arith.constant 0 : index
    %c0_39 = arith.constant 0 : index
    %66 = vector.load %arg7[%c0_38, %c0_39] : memref<1x128xf32, #tpu.memory_space<vmem>>, vector<1x128xf32>
    %67 = vector.broadcast %66 : vector<1x128xf32> to vector<8x128xf32>
    %68 = arith.addf %65, %67 : vector<8x128xf32>
    %c0_40 = arith.constant 0 : index
    %c0_41 = arith.constant 0 : index
    %69 = vector.load %arg8[%c0_40, %c0_41] : memref<8x128xf32, #tpu.memory_space<vmem>>, vector<8x128xf32>
    tpu.vector_store %arg8[%c0_40, %c0_41], %68 {strides = array<i32>} : memref<8x128xf32, #tpu.memory_space<vmem>>, vector<8x128xf32>,
    return
  }
  func.func @transform_0(%arg0: i32) -> (i32, i32) {
    %c0_i32 = arith.constant 0 : i32
    %c0_i32_0 = arith.constant 0 : i32
    return %arg0, %c0_i32 : i32, i32
  }
  func.func @transform_1(%arg0: i32) -> (i32, i32) {
    %c0_i32 = arith.constant 0 : i32
    %c0_i32_0 = arith.constant 0 : i32
    %c0_i32_1 = arith.constant 0 : i32
    return %c0_i32, %c0_i32_0 : i32, i32
  }
  func.func @transform_2(%arg0: i32) -> (i32, i32) {
    %c0_i32 = arith.constant 0 : i32
    %c0_i32_0 = arith.constant 0 : i32
    %c0_i32_1 = arith.constant 0 : i32
    return %c0_i32, %c0_i32_0 : i32, i32
  }
  func.func @transform_3(%arg0: i32) -> (i32, i32, i32) {
    %c0_i32 = arith.constant 0 : i32
    %c0_i32_0 = arith.constant 0 : i32
    %c0_i32_1 = arith.constant 0 : i32
    %c0_i32_2 = arith.constant 0 : i32
    return %c0_i32, %c0_i32_0, %c0_i32_1 : i32, i32, i32
  }
  func.func @transform_4(%arg0: i32) -> (i32, i32, i32) {
    %c0_i32 = arith.constant 0 : i32
    %c0_i32_0 = arith.constant 0 : i32
    %c0_i32_1 = arith.constant 0 : i32
    %c0_i32_2 = arith.constant 0 : i32
    return %c0_i32, %c0_i32_0, %c0_i32_1 : i32, i32, i32
  }
  func.func @transform_5(%arg0: i32) -> (i32, i32) {
    %c0_i32 = arith.constant 0 : i32
    %c0_i32_0 = arith.constant 0 : i32
    %c0_i32_1 = arith.constant 0 : i32
    return %c0_i32, %c0_i32_0 : i32, i32
  }
  func.func @transform_6(%arg0: i32) -> (i32, i32) {
    %c0_i32 = arith.constant 0 : i32
    %c0_i32_0 = arith.constant 0 : i32
    %c0_i32_1 = arith.constant 0 : i32
    return %c0_i32, %c0_i32_0 : i32, i32
  }
  func.func @transform_7(%arg0: i32) -> (i32, i32) {
    %c0_i32 = arith.constant 0 : i32
    %c0_i32_0 = arith.constant 0 : i32
    return %arg0, %c0_i32 : i32, i32
  }
}

</mosaic_0001>

<llo_original>
// kernel: tpu_custom_call.1
$region0: #{tpu_custom_call.1}
  #allocation0 [shape = 'u32[]', space=smem, size = 0x4, offset = 0x4, fixed_abs, tag = 'smem constant byte address 0x4 - core index']
  #allocation1 [shape = 'u32[72,128]{1,0:T(1,128)}', space=vmem, size = 0x9000, scoped, tag = 'internal scratch']
  %s0 = inlined_call_operand.hbm [shape: f32[8,128], index: 0, kind: input, shape index: {}]
  %s1 = inlined_call_operand.hbm [shape: f32[128,128], index: 1, kind: input, shape index: {}]
  %s2 = inlined_call_operand.vmem [shape: f32[1,128], index: 2, kind: input, shape index: {}]
  %s3 = inlined_call_operand.hbm [shape: f32[4,128,128], index: 3, kind: input, shape index: {}]
  %s4 = inlined_call_operand.hbm [shape: f32[4,1,128], index: 4, kind: input, shape index: {}]
  %s5 = inlined_call_operand.hbm [shape: f32[128,128], index: 5, kind: input, shape index: {}]
  %s6 = inlined_call_operand.vmem [shape: f32[1,128], index: 6, kind: input, shape index: {}]
  %s7 = inlined_call_operand.hbm [shape: f32[8,128], index: 7, kind: output, shape index: {}]
  %s8 = sld [smem:[#allocation0]]
  $region58: #{tpu_custom_call.1} parent=0
    _
  %s10 = ssub.s32 1, %s8
  %s11 = scalar_select 0, %s10, %s8
  $region1: #{tpu_custom_call.1} parent=0
    #allocation2 [shape = 'u8[4096]{0}', space=vmem, size = 0x1000, scoped, tag = 'input window, operand 0, single buffered']
    #allocation3 [shape = 's32[1]{0}', space=sflag, size = 0x4, scoped, tag = 'scoped memory for tpu_custom_call.1']
    #allocation4 [shape = 's32[1]{0}', space=sflag, size = 0x4, scoped, tag = 'scoped memory for tpu_custom_call.1']
    #allocation5 [shape = 'u8[65536]{0}', space=vmem, size = 0x10000, scoped, tag = 'input window, operand 1, single buffered']
    #allocation6 [shape = 's32[1]{0}', space=sflag, size = 0x4, scoped, tag = 'scoped memory for tpu_custom_call.1']
    #allocation7 [shape = 'u8[262144]{0}', space=vmem, size = 0x40000, scoped, tag = 'input window, operand 3, single buffered']
    #allocation8 [shape = 'u8[2048]{0}', space=vmem, size = 0x800, scoped, tag = 'input window, operand 4, single buffered']
    #allocation9 [shape = 's32[1]{0}', space=sflag, size = 0x4, scoped, tag = 'scoped memory for tpu_custom_call.1']
    #allocation10 [shape = 'u8[65536]{0}', space=vmem, size = 0x10000, scoped, tag = 'input window, operand 5, single buffered']
    #allocation11 [shape = 'u8[4096]{0}', space=vmem, size = 0x1000, scoped, tag = 'output window, operand 0, single buffered']
    %12 = vsyncpa [#allocation3], 0
    %13 = vsyncpa [#allocation6], 0
    %14 = vsyncpa [#allocation9], 0
    %15 = vsyncpa [#allocation4], 0
    // Predicated region
    $region2: #{tpu_custom_call.1} parent=1 // pred_check
      _
    $region3: #{tpu_custom_call.1} parent=1 // pred_check_branch
      %17 = sbr.rel (0) target = $region5
    $region4: #{tpu_custom_call.1} parent=1 // pred_region
      %19 = vsyncadd [#allocation3], 0
      %s21 = sshll.u32 %s0, 4
      %s22 = int_to_ptr.hbm [resolvable:$true] %s21
      %s23 = sshll.u32 [#allocation2], 4
      %s24 = int_to_ptr.vmem [resolvable:$true] %s23
      %26 = dma.hbm_to_vmem [thread:$0]  %s22, 128, %s24, [#allocation3]
    $region5: #{tpu_custom_call.1} parent=1 // pred_fallthru
      _
    // Predicated region
    $region6: #{tpu_custom_call.1} parent=1 // pred_check
      _
    $region7: #{tpu_custom_call.1} parent=1 // pred_check_branch
      %28 = sbr.rel (0) target = $region9
    $region8: #{tpu_custom_call.1} parent=1 // pred_region
      %30 = vsyncadd [#allocation6], 0
      %s31 = sshll.u32 %s1, 4
      %s32 = int_to_ptr.hbm [resolvable:$true] %s31
      %s33 = sshll.u32 [#allocation5], 4
      %s34 = int_to_ptr.vmem [resolvable:$true] %s33
      %39 = dma.hbm_to_vmem [thread:$0]  %s32, 2048, %s34, [#allocation6], 128, 128, 8
    $region9: #{tpu_custom_call.1} parent=1 // pred_fallthru
      _
    // Predicated region
    $region10: #{tpu_custom_call.1} parent=1 // pred_check
      _
    $region11: #{tpu_custom_call.1} parent=1 // pred_check_branch
      %41 = sbr.rel (0) target = $region13
    $region12: #{tpu_custom_call.1} parent=1 // pred_region
      _
    $region13: #{tpu_custom_call.1} parent=1 // pred_fallthru
      _
    // Predicated region
    $region14: #{tpu_custom_call.1} parent=1 // pred_check
      _
    $region15: #{tpu_custom_call.1} parent=1 // pred_check_branch
      %43 = sbr.rel (0) target = $region17
    $region16: #{tpu_custom_call.1} parent=1 // pred_region
      %45 = vsyncadd [#allocation6], 0
      %s46 = sshll.u32 %s3, 4
      %s47 = int_to_ptr.hbm [resolvable:$true] %s46
      %s48 = sshll.u32 [#allocation7], 4
      %s49 = int_to_ptr.vmem [resolvable:$true] %s48
      %54 = dma.hbm_to_vmem [thread:$0]  %s47, 8192, %s49, [#allocation6], 128, 128, 8
    $region17: #{tpu_custom_call.1} parent=1 // pred_fallthru
      _
    // Predicated region
    $region18: #{tpu_custom_call.1} parent=1 // pred_check
      _
    $region19: #{tpu_custom_call.1} parent=1 // pred_check_branch
      %56 = sbr.rel (0) target = $region21
    $region20: #{tpu_custom_call.1} parent=1 // pred_region
      %58 = vsyncadd [#allocation9], 0
      %s59 = sshll.u32 %s4, 4
      %s60 = int_to_ptr.hbm [resolvable:$true] %s59
      %s61 = sshll.u32 [#allocation8], 4
      %s62 = int_to_ptr.vmem [resolvable:$true] %s61
      %67 = dma.hbm_to_vmem [thread:$0]  %s60, 64, %s62, [#allocation9], 16, 16, 1
    $region21: #{tpu_custom_call.1} parent=1 // pred_fallthru
      _
    // Predicated region
    $region22: #{tpu_custom_call.1} parent=1 // pred_check
      _
    $region23: #{tpu_custom_call.1} parent=1 // pred_check_branch
      %69 = sbr.rel (0) target = $region25
    $region24: #{tpu_custom_call.1} parent=1 // pred_region
      %71 = vsyncadd [#allocation9], 0
      %s72 = sshll.u32 %s5, 4
      %s73 = int_to_ptr.hbm [resolvable:$true] %s72
      %s74 = sshll.u32 [#allocation10], 4
      %s75 = int_to_ptr.vmem [resolvable:$true] %s74
      %80 = dma.hbm_to_vmem [thread:$0]  %s73, 2048, %s75, [#allocation9], 128, 128, 8
    $region25: #{tpu_custom_call.1} parent=1 // pred_fallthru
      _
    // Predicated region
    $region26: #{tpu_custom_call.1} parent=1 // pred_check
      _
    $region27: #{tpu_custom_call.1} parent=1 // pred_check_branch
      %82 = sbr.rel (0) target = $region29
    $region28: #{tpu_custom_call.1} parent=1 // pred_region
      _
    $region29: #{tpu_custom_call.1} parent=1 // pred_fallthru
      _
    // Predicated region
    $region30: #{tpu_custom_call.1} parent=1 // pred_check
      _
    $region31: #{tpu_custom_call.1} parent=1 // pred_check_branch
      %84 = sbr.rel (0) target = $region33
    $region32: #{tpu_custom_call.1} parent=1 // pred_region
      %86 = dma.done [#allocation3], 128
    $region33: #{tpu_custom_call.1} parent=1 // pred_fallthru
      _
    // Predicated region
    $region34: #{tpu_custom_call.1} parent=1 // pred_check
      _
    $region35: #{tpu_custom_call.1} parent=1 // pred_check_branch
      %88 = sbr.rel (0) target = $region37
    $region36: #{tpu_custom_call.1} parent=1 // pred_region
      %90 = dma.done [#allocation6], 2048
    $region37: #{tpu_custom_call.1} parent=1 // pred_fallthru
      _
    // Predicated region
    $region38: #{tpu_custom_call.1} parent=1 // pred_check
      _
    $region39: #{tpu_custom_call.1} parent=1 // pred_check_branch
      %92 = sbr.rel (0) target = $region41
    $region40: #{tpu_custom_call.1} parent=1 // pred_region
      %94 = dma.done [#allocation6], 8192
    $region41: #{tpu_custom_call.1} parent=1 // pred_fallthru
      _
    // Predicated region
    $region42: #{tpu_custom_call.1} parent=1 // pred_check
      _
    $region43: #{tpu_custom_call.1} parent=1 // pred_check_branch
      %96 = sbr.rel (0) target = $region45
    $region44: #{tpu_custom_call.1} parent=1 // pred_region
      %98 = dma.done [#allocation9], 64
    $region45: #{tpu_custom_call.1} parent=1 // pred_fallthru
      _
    // Predicated region
    $region46: #{tpu_custom_call.1} parent=1 // pred_check
      _
    $region47: #{tpu_custom_call.1} parent=1 // pred_check_branch
      %100 = sbr.rel (0) target = $region49
    $region48: #{tpu_custom_call.1} parent=1 // pred_region
      %102 = dma.done [#allocation9], 2048
    $region49: #{tpu_custom_call.1} parent=1 // pred_fallthru
      _
    %v103 = vld [vmem:[#allocation2] sm:$0xff]
    %v104 = vld [vmem:[#allocation5] sm:$0xff]
    %v105 = vld [vmem:[#allocation5 + $0x8] sm:$0xff]
    %v106 = vld [vmem:[#allocation5 + $0x10] sm:$0xff]
    %v107 = vld [vmem:[#allocation5 + $0x18] sm:$0xff]
    %v108 = vld [vmem:[#allocation5 + $0x20] sm:$0xff]
    %v109 = vld [vmem:[#allocation5 + $0x28] sm:$0xff]
    %v110 = vld [vmem:[#allocation5 + $0x30] sm:$0xff]
    %v111 = vld [vmem:[#allocation5 + $0x38] sm:$0xff]
    %v112 = vld [vmem:[#allocation5 + $0x40] sm:$0xff]
    %v113 = vld [vmem:[#allocation5 + $0x48] sm:$0xff]
    %v114 = vld [vmem:[#allocation5 + $0x50] sm:$0xff]
    %v115 = vld [vmem:[#allocation5 + $0x58] sm:$0xff]
    %v116 = vld [vmem:[#allocation5 + $0x60] sm:$0xff]
    %v117 = vld [vmem:[#allocation5 + $0x68] sm:$0xff]
    %v118 = vld [vmem:[#allocation5 + $0x70] sm:$0xff]
    %v119 = vld [vmem:[#allocation5 + $0x78] sm:$0xff]
    %v120 = vld [vmem:[%s2] sm:$0x1]
    %v122 = vperm.slane %v120, 0
    %124 = vmatpush.msra.mxu0 %v119
    %125 = vmatpush.msra.mxu0 %v118
    %126 = vmatpush.msra.mxu0 %v117
    %127 = vmatpush.msra.mxu0 %v116
    %128 = vmatpush.msra.mxu0 %v115
    %129 = vmatpush.msra.mxu0 %v114
    %130 = vmatpush.msra.mxu0 %v113
    %131 = vmatpush.msra.mxu0 %v112
    %132 = vmatpush.msra.mxu0 %v111
    %133 = vmatpush.msra.mxu0 %v110
    %134 = vmatpush.msra.mxu0 %v109
    %135 = vmatpush.msra.mxu0 %v108
    %136 = vmatpush.msra.mxu0 %v107
    %137 = vmatpush.msra.mxu0 %v106
    %138 = vmatpush.msra.mxu0 %v105
    %139 = vmatpush.msra.mxu0 %v104
    %140 = vmatmul.f32.gmra.mxu0 %v103
    %v141 = vpop.f32.mrf.mxu0
    %v142 = vadd.f32 %v122, %v141
    %143 = vdwg.mxu0
    %v144 = vxor.u32 %v142, 2147483648
    %v145 = vmul.f32 %v144, 1.442695
    %v146 = vpow.pop %v145
    %v147 = vadd.f32 %v146, 1.0
    %v148 = vrcp.pop %v147
    %v149 = vmul.f32 %v147, %v148
    %v150 = vsub.f32 1.0, %v149
    %v151 = vmul.f32 %v148, %v150
    %v152 = vadd.f32 %v148, %v151
    %vm153 = vweird.f32 %v147
    %vm154 = vweird.f32 %v148
    %vm155 = vmor %vm153, %vm154
    %v156 = vsel %vm155, %v148, %v152
    %v157 = vand.u32 2147483647, %v147
    %vm158 = vcmp.eq.f32.partialorder %v157, 8.507059e+37
    %v159 = vand.u32 %v147, 2147483648
    %v160 = vor.u32 1.1754944e-38, %v159
    %v161 = vsel %vm158, %v160, %v156
    %v162 = vmul.f32 1.0, %v161
    %v163 = vmul.f32 %v142, %v162
    %v164 = vld [vmem:[#allocation7] sm:$0xff]
    %v165 = vld [vmem:[#allocation7 + $0x8] sm:$0xff]
    %v166 = vld [vmem:[#allocation7 + $0x10] sm:$0xff]
    %v167 = vld [vmem:[#allocation7 + $0x18] sm:$0xff]
    %v168 = vld [vmem:[#allocation7 + $0x20] sm:$0xff]
    %v169 = vld [vmem:[#allocation7 + $0x28] sm:$0xff]
    %v170 = vld [vmem:[#allocation7 + $0x30] sm:$0xff]
    %v171 = vld [vmem:[#allocation7 + $0x38] sm:$0xff]
    %v172 = vld [vmem:[#allocation7 + $0x40] sm:$0xff]
    %v173 = vld [vmem:[#allocation7 + $0x48] sm:$0xff]
    %v174 = vld [vmem:[#allocation7 + $0x50] sm:$0xff]
    %v175 = vld [vmem:[#allocation7 + $0x58] sm:$0xff]
    %v176 = vld [vmem:[#allocation7 + $0x60] sm:$0xff]
    %v177 = vld [vmem:[#allocation7 + $0x68] sm:$0xff]
    %v178 = vld [vmem:[#allocation7 + $0x70] sm:$0xff]
    %v179 = vld [vmem:[#allocation7 + $0x78] sm:$0xff]
    %v180 = vld [vmem:[#allocation8] sm:$0x1]
    %v182 = vperm.slane %v180, 0
    %184 = vmatpush.msra.mxu0 %v179
    %185 = vmatpush.msra.mxu0 %v178
    %186 = vmatpush.msra.mxu0 %v177
    %187 = vmatpush.msra.mxu0 %v176
    %188 = vmatpush.msra.mxu0 %v175
    %189 = vmatpush.msra.mxu0 %v174
    %190 = vmatpush.msra.mxu0 %v173
    %191 = vmatpush.msra.mxu0 %v172
    %192 = vmatpush.msra.mxu0 %v171
    %193 = vmatpush.msra.mxu0 %v170
    %194 = vmatpush.msra.mxu0 %v169
    %195 = vmatpush.msra.mxu0 %v168
    %196 = vmatpush.msra.mxu0 %v167
    %197 = vmatpush.msra.mxu0 %v166
    %198 = vmatpush.msra.mxu0 %v165
    %199 = vmatpush.msra.mxu0 %v164
    %200 = vmatmul.f32.gmra.mxu0 %v163
    %v201 = vpop.f32.mrf.mxu0
    %v202 = vadd.f32 %v182, %v201
    %203 = vdwg.mxu0
    %v204 = vxor.u32 %v202, 2147483648
    %v205 = vmul.f32 %v204, 1.442695
    %v206 = vpow.pop %v205
    %v207 = vadd.f32 %v206, 1.0
    %v208 = vrcp.pop %v207
    %v209 = vmul.f32 %v207, %v208
    %v210 = vsub.f32 1.0, %v209
    %v211 = vmul.f32 %v208, %v210
    %v212 = vadd.f32 %v208, %v211
    %vm213 = vweird.f32 %v207
    %vm214 = vweird.f32 %v208
    %vm215 = vmor %vm213, %vm214
    %v216 = vsel %vm215, %v208, %v212
    %v217 = vand.u32 2147483647, %v207
    %vm218 = vcmp.eq.f32.partialorder %v217, 8.507059e+37
    %v219 = vand.u32 %v207, 2147483648
    %v220 = vor.u32 1.1754944e-38, %v219
    %v221 = vsel %vm218, %v220, %v216
    %v222 = vmul.f32 1.0, %v221
    %v223 = vmul.f32 %v202, %v222
    %s224 = scalar_lea.vmem [#allocation7], 128
    %v225 = vld [vmem:[%s224] sm:$0xff]
    %v226 = vld [vmem:[%s224 + $0x8] sm:$0xff]
    %v227 = vld [vmem:[%s224 + $0x10] sm:$0xff]
    %v228 = vld [vmem:[%s224 + $0x18] sm:$0xff]
    %v229 = vld [vmem:[%s224 + $0x20] sm:$0xff]
    %v230 = vld [vmem:[%s224 + $0x28] sm:$0xff]
    %v231 = vld [vmem:[%s224 + $0x30] sm:$0xff]
    %v232 = vld [vmem:[%s224 + $0x38] sm:$0xff]
    %v233 = vld [vmem:[%s224 + $0x40] sm:$0xff]
    %v234 = vld [vmem:[%s224 + $0x48] sm:$0xff]
    %v235 = vld [vmem:[%s224 + $0x50] sm:$0xff]
    %v236 = vld [vmem:[%s224 + $0x58] sm:$0xff]
    %v237 = vld [vmem:[%s224 + $0x60] sm:$0xff]
    %v238 = vld [vmem:[%s224 + $0x68] sm:$0xff]
    %v239 = vld [vmem:[%s224 + $0x70] sm:$0xff]
    %v240 = vld [vmem:[%s224 + $0x78] sm:$0xff]
    %s241 = scalar_lea.vmem [#allocation8], 1
    %v242 = vld [vmem:[%s241] sm:$0x1]
    %v244 = vperm.slane %v242, 0
    %246 = vmatpush.msra.mxu0 %v240
    %247 = vmatpush.msra.mxu0 %v239
    %248 = vmatpush.msra.mxu0 %v238
    %249 = vmatpush.msra.mxu0 %v237
    %250 = vmatpush.msra.mxu0 %v236
    %251 = vmatpush.msra.mxu0 %v235
    %252 = vmatpush.msra.mxu0 %v234
    %253 = vmatpush.msra.mxu0 %v233
    %254 = vmatpush.msra.mxu0 %v232
    %255 = vmatpush.msra.mxu0 %v231
    %256 = vmatpush.msra.mxu0 %v230
    %257 = vmatpush.msra.mxu0 %v229
    %258 = vmatpush.msra.mxu0 %v228
    %259 = vmatpush.msra.mxu0 %v227
    %260 = vmatpush.msra.mxu0 %v226
    %261 = vmatpush.msra.mxu0 %v225
    %262 = vmatmul.f32.gmra.mxu0 %v223
    %v263 = vpop.f32.mrf.mxu0
    %v264 = vadd.f32 %v244, %v263
    %265 = vdwg.mxu0
    %v266 = vxor.u32 %v264, 2147483648
    %v267 = vmul.f32 %v266, 1.442695
    %v268 = vpow.pop %v267
    %v269 = vadd.f32 %v268, 1.0
    %v270 = vrcp.pop %v269
    %v271 = vmul.f32 %v269, %v270
    %v272 = vsub.f32 1.0, %v271
    %v273 = vmul.f32 %v270, %v272
    %v274 = vadd.f32 %v270, %v273
    %vm275 = vweird.f32 %v269
    %vm276 = vweird.f32 %v270
    %vm277 = vmor %vm275, %vm276
    %v278 = vsel %vm277, %v270, %v274
    %v279 = vand.u32 2147483647, %v269
    %vm280 = vcmp.eq.f32.partialorder %v279, 8.507059e+37
    %v281 = vand.u32 %v269, 2147483648
    %v282 = vor.u32 1.1754944e-38, %v281
    %v283 = vsel %vm280, %v282, %v278
    %v284 = vmul.f32 1.0, %v283
    %v285 = vmul.f32 %v264, %v284
    %s286 = scalar_lea.vmem [#allocation7], 256
    %v287 = vld [vmem:[%s286] sm:$0xff]
    %v288 = vld [vmem:[%s286 + $0x8] sm:$0xff]
    %v289 = vld [vmem:[%s286 + $0x10] sm:$0xff]
    %v290 = vld [vmem:[%s286 + $0x18] sm:$0xff]
    %v291 = vld [vmem:[%s286 + $0x20] sm:$0xff]
    %v292 = vld [vmem:[%s286 + $0x28] sm:$0xff]
    %v293 = vld [vmem:[%s286 + $0x30] sm:$0xff]
    %v294 = vld [vmem:[%s286 + $0x38] sm:$0xff]
    %v295 = vld [vmem:[%s286 + $0x40] sm:$0xff]
    %v296 = vld [vmem:[%s286 + $0x48] sm:$0xff]
    %v297 = vld [vmem:[%s286 + $0x50] sm:$0xff]
    %v298 = vld [vmem:[%s286 + $0x58] sm:$0xff]
    %v299 = vld [vmem:[%s286 + $0x60] sm:$0xff]
    %v300 = vld [vmem:[%s286 + $0x68] sm:$0xff]
    %v301 = vld [vmem:[%s286 + $0x70] sm:$0xff]
    %v302 = vld [vmem:[%s286 + $0x78] sm:$0xff]
    %s303 = scalar_lea.vmem [#allocation8], 2
    %v304 = vld [vmem:[%s303] sm:$0x1]
    %v306 = vperm.slane %v304, 0
    %308 = vmatpush.msra.mxu0 %v302
    %309 = vmatpush.msra.mxu0 %v301
    %310 = vmatpush.msra.mxu0 %v300
    %311 = vmatpush.msra.mxu0 %v299
    %312 = vmatpush.msra.mxu0 %v298
    %313 = vmatpush.msra.mxu0 %v297
    %314 = vmatpush.msra.mxu0 %v296
    %315 = vmatpush.msra.mxu0 %v295
    %316 = vmatpush.msra.mxu0 %v294
    %317 = vmatpush.msra.mxu0 %v293
    %318 = vmatpush.msra.mxu0 %v292
    %319 = vmatpush.msra.mxu0 %v291
    %320 = vmatpush.msra.mxu0 %v290
    %321 = vmatpush.msra.mxu0 %v289
    %322 = vmatpush.msra.mxu0 %v288
    %323 = vmatpush.msra.mxu0 %v287
    %324 = vmatmul.f32.gmra.mxu0 %v285
    %v325 = vpop.f32.mrf.mxu0
    %v326 = vadd.f32 %v306, %v325
    %327 = vdwg.mxu0
    %v328 = vxor.u32 %v326, 2147483648
    %v329 = vmul.f32 %v328, 1.442695
    %v330 = vpow.pop %v329
    %v331 = vadd.f32 %v330, 1.0
    %v332 = vrcp.pop %v331
    %v333 = vmul.f32 %v331, %v332
    %v334 = vsub.f32 1.0, %v333
    %v335 = vmul.f32 %v332, %v334
    %v336 = vadd.f32 %v332, %v335
    %vm337 = vweird.f32 %v331
    %vm338 = vweird.f32 %v332
    %vm339 = vmor %vm337, %vm338
    %v340 = vsel %vm339, %v332, %v336
    %v341 = vand.u32 2147483647, %v331
    %vm342 = vcmp.eq.f32.partialorder %v341, 8.507059e+37
    %v343 = vand.u32 %v331, 2147483648
    %v344 = vor.u32 1.1754944e-38, %v343
    %v345 = vsel %vm342, %v344, %v340
    %v346 = vmul.f32 1.0, %v345
    %v347 = vmul.f32 %v326, %v346
    %s348 = scalar_lea.vmem [#allocation7], 384
    %v349 = vld [vmem:[%s348] sm:$0xff]
    %v350 = vld [vmem:[%s348 + $0x8] sm:$0xff]
    %v351 = vld [vmem:[%s348 + $0x10] sm:$0xff]
    %v352 = vld [vmem:[%s348 + $0x18] sm:$0xff]
    %v353 = vld [vmem:[%s348 + $0x20] sm:$0xff]
    %v354 = vld [vmem:[%s348 + $0x28] sm:$0xff]
    %v355 = vld [vmem:[%s348 + $0x30] sm:$0xff]
    %v356 = vld [vmem:[%s348 + $0x38] sm:$0xff]
    %v357 = vld [vmem:[%s348 + $0x40] sm:$0xff]
    %v358 = vld [vmem:[%s348 + $0x48] sm:$0xff]
    %v359 = vld [vmem:[%s348 + $0x50] sm:$0xff]
    %v360 = vld [vmem:[%s348 + $0x58] sm:$0xff]
    %v361 = vld [vmem:[%s348 + $0x60] sm:$0xff]
    %v362 = vld [vmem:[%s348 + $0x68] sm:$0xff]
    %v363 = vld [vmem:[%s348 + $0x70] sm:$0xff]
    %v364 = vld [vmem:[%s348 + $0x78] sm:$0xff]
    %s365 = scalar_lea.vmem [#allocation8], 3
    %v366 = vld [vmem:[%s365] sm:$0x1]
    %v368 = vperm.slane %v366, 0
    %370 = vmatpush.msra.mxu0 %v364
    %371 = vmatpush.msra.mxu0 %v363
    %372 = vmatpush.msra.mxu0 %v362
    %373 = vmatpush.msra.mxu0 %v361
    %374 = vmatpush.msra.mxu0 %v360
    %375 = vmatpush.msra.mxu0 %v359
    %376 = vmatpush.msra.mxu0 %v358
    %377 = vmatpush.msra.mxu0 %v357
    %378 = vmatpush.msra.mxu0 %v356
    %379 = vmatpush.msra.mxu0 %v355
    %380 = vmatpush.msra.mxu0 %v354
    %381 = vmatpush.msra.mxu0 %v353
    %382 = vmatpush.msra.mxu0 %v352
    %383 = vmatpush.msra.mxu0 %v351
    %384 = vmatpush.msra.mxu0 %v350
    %385 = vmatpush.msra.mxu0 %v349
    %386 = vmatmul.f32.gmra.mxu0 %v347
    %v387 = vpop.f32.mrf.mxu0
    %v388 = vadd.f32 %v368, %v387
    %389 = vdwg.mxu0
    %v390 = vxor.u32 %v388, 2147483648
    %v391 = vmul.f32 %v390, 1.442695
    %v392 = vpow.pop %v391
    %v393 = vadd.f32 %v392, 1.0
    %v394 = vrcp.pop %v393
    %v395 = vmul.f32 %v393, %v394
    %v396 = vsub.f32 1.0, %v395
    %v397 = vmul.f32 %v394, %v396
    %v398 = vadd.f32 %v394, %v397
    %vm399 = vweird.f32 %v393
    %vm400 = vweird.f32 %v394
    %vm401 = vmor %vm399, %vm400
    %v402 = vsel %vm401, %v394, %v398
    %v403 = vand.u32 2147483647, %v393
    %vm404 = vcmp.eq.f32.partialorder %v403, 8.507059e+37
    %v405 = vand.u32 %v393, 2147483648
    %v406 = vor.u32 1.1754944e-38, %v405
    %v407 = vsel %vm404, %v406, %v402
    %v408 = vmul.f32 1.0, %v407
    %v409 = vmul.f32 %v388, %v408
    %v410 = vld [vmem:[#allocation10] sm:$0xff]
    %v411 = vld [vmem:[#allocation10 + $0x8] sm:$0xff]
    %v412 = vld [vmem:[#allocation10 + $0x10] sm:$0xff]
    %v413 = vld [vmem:[#allocation10 + $0x18] sm:$0xff]
    %v414 = vld [vmem:[#allocation10 + $0x20] sm:$0xff]
    %v415 = vld [vmem:[#allocation10 + $0x28] sm:$0xff]
    %v416 = vld [vmem:[#allocation10 + $0x30] sm:$0xff]
    %v417 = vld [vmem:[#allocation10 + $0x38] sm:$0xff]
    %v418 = vld [vmem:[#allocation10 + $0x40] sm:$0xff]
    %v419 = vld [vmem:[#allocation10 + $0x48] sm:$0xff]
    %v420 = vld [vmem:[#allocation10 + $0x50] sm:$0xff]
    %v421 = vld [vmem:[#allocation10 + $0x58] sm:$0xff]
    %v422 = vld [vmem:[#allocation10 + $0x60] sm:$0xff]
    %v423 = vld [vmem:[#allocation10 + $0x68] sm:$0xff]
    %v424 = vld [vmem:[#allocation10 + $0x70] sm:$0xff]
    %v425 = vld [vmem:[#allocation10 + $0x78] sm:$0xff]
    %v426 = vld [vmem:[%s6] sm:$0x1]
    %v428 = vperm.slane %v426, 0
    %430 = vmatpush.msra.mxu0 %v425
    %431 = vmatpush.msra.mxu0 %v424
    %432 = vmatpush.msra.mxu0 %v423
    %433 = vmatpush.msra.mxu0 %v422
    %434 = vmatpush.msra.mxu0 %v421
    %435 = vmatpush.msra.mxu0 %v420
    %436 = vmatpush.msra.mxu0 %v419
    %437 = vmatpush.msra.mxu0 %v418
    %438 = vmatpush.msra.mxu0 %v417
    %439 = vmatpush.msra.mxu0 %v416
    %440 = vmatpush.msra.mxu0 %v415
    %441 = vmatpush.msra.mxu0 %v414
    %442 = vmatpush.msra.mxu0 %v413
    %443 = vmatpush.msra.mxu0 %v412
    %444 = vmatpush.msra.mxu0 %v411
    %445 = vmatpush.msra.mxu0 %v410
    %446 = vmatmul.f32.gmra.mxu0 %v409
    %v447 = vpop.f32.mrf.mxu0
    %v448 = vadd.f32 %v428, %v447
    %449 = vdwg.mxu0
    %450 = vst [vmem:[#allocation11] sm:$0xff] %v448
    // Predicated region
    $region50: #{tpu_custom_call.1} parent=1 // pred_check
      _
    $region51: #{tpu_custom_call.1} parent=1 // pred_check_branch
      %452 = sbr.rel (0) target = $region53
    $region52: #{tpu_custom_call.1} parent=1 // pred_region
      %454 = vsyncadd [#allocation4], 0
      %s456 = sshll.u32 [#allocation11], 4
      %s457 = int_to_ptr.vmem [resolvable:$true] %s456
      %s458 = sshll.u32 %s7, 4
      %s459 = int_to_ptr.hbm [resolvable:$true] %s458
      %461 = dma.vmem_to_hbm [thread:$0]  %s457, 128, %s459, [#allocation4]
    $region53: #{tpu_custom_call.1} parent=1 // pred_fallthru
      _
    // Predicated region
    $region54: #{tpu_custom_call.1} parent=1 // pred_check
      _
    $region55: #{tpu_custom_call.1} parent=1 // pred_check_branch
      %463 = sbr.rel (0) target = $region57
    $region56: #{tpu_custom_call.1} parent=1 // pred_region
      %465 = dma.done [#allocation4], 128
    $region57: #{tpu_custom_call.1} parent=1 // pred_fallthru
      _
    %466 = vsyncpa [#allocation3], 1
    %467 = vsyncpa [#allocation6], 1
    %468 = vsyncpa [#allocation9], 1
    %469 = vsyncpa [#allocation4], 1

</llo_original>
